<compile_context>
chip_gen: v7x
topology: tpu7x:2x2x1
jax: 0.10.0
libtpu: 0.0.40
codegen_flags: <defaults>
</compile_context>

<pallas_src>
import functools

import numpy as np
import jax
import jax.numpy as jnp
from jax.experimental import pallas as pl
from jax.experimental.pallas import tpu as pltpu


def _round_up(a, m):
    return (a + m - 1) // m * m


def _dft_bases_packed(L, F, W):
    """Packed real-DFT bases (float32).

    Bf: (L, W) with  x @ Bf -> reim   (Re in lanes [0, F), Im in lanes
        [W//2, W//2 + F), all other lanes zero).
    Bi: (W, L) with  reim @ Bi -> irfft  (rows where Bf is zero are zero).
    """
    half = W // 2
    n = np.arange(L)[:, None].astype(np.float64)
    k = np.arange(F)[None, :].astype(np.float64)
    ang = 2.0 * np.pi * n * k / L                      # (L, F)
    cf = np.cos(ang)                                   # Re = x @ cf
    sf = -np.sin(ang)                                  # Im = x @ sf

    w = np.full((F,), 2.0)
    w[0] = 1.0
    if L % 2 == 0:
        w[-1] = 1.0
    ang_inv = 2.0 * np.pi * np.arange(F)[:, None] * np.arange(L)[None, :] / L
    ci = (w[:, None] * np.cos(ang_inv)) / L            # (F, L)
    si = -(w[:, None] * np.sin(ang_inv)) / L           # (F, L)

    Bf = np.zeros((L, W), dtype=np.float32)
    Bf[:, :F] = cf
    Bf[:, half:half + F] = sf
    Bi = np.zeros((W, L), dtype=np.float32)
    Bi[:F, :] = ci
    Bi[half:half + F, :] = si
    return jnp.asarray(Bf), jnp.asarray(Bi)


def _kth_kernel(x_ref, bf_ref, kth_ref, *, top_k, half, rows_batch0,
                total_rows, tile_rows):
    """Pass 1: per-row-tile min of each row's k-th largest squared |X_k|."""
    x = x_ref[...].astype(jnp.float32)                               # (T, L)
    reim = jnp.dot(x, bf_ref[...], preferred_element_type=jnp.float32)  # (T, W)
    sq = reim * reim
    # |X|^2 = Re^2 + Im^2 via one XLU lane-roll of half the packed width.
    freq2 = sq + pltpu.roll(sq, shift=half, axis=1)                  # (T, W)

    T, Wd = freq2.shape
    col = jax.lax.broadcasted_iota(jnp.int32, (T, Wd), 1)
    grow = (pl.program_id(0) * tile_rows
            + jax.lax.broadcasted_iota(jnp.int32, (T, 1), 0))

    # torch: freq[0] = 0 zeroes the whole first-batch slice (global rows < C);
    # also drop the duplicated Im half (col >= half).  Remaining zero lanes
    # can never displace a top-k value of non-negative magnitudes.
    work = jnp.where((col < half) & (grow >= rows_batch0), freq2, 0.0)

    # k-th largest counting duplicates (torch.topk semantics): remove one
    # instance of the current max, top_k times.
    kth = None
    for _ in range(top_k):
        kth = jnp.max(work, axis=-1, keepdims=True)                  # (T, 1)
        first = jnp.min(jnp.where(work == kth, col, Wd), axis=-1,
                        keepdims=True)
        work = jnp.where(col == first, -1.0, work)                   # can't re-win

    # Per-tile min of per-row kth; padded rows (>= total_rows) excluded.
    row_kth = jnp.where(grow < total_rows, kth, jnp.inf)
    tile_min = jnp.min(row_kth, axis=0, keepdims=True)               # (1, 1)
    kth_ref[...] = jnp.broadcast_to(tile_min, kth_ref.shape)         # lane-dense


def _decomp_kernel(thr_ref, x_ref, bf_ref, bi_ref, season_ref, trend_ref, *,
                   half, rows_batch0, tile_rows):
    """Pass 2: threshold the spectrum, fused inverse DFT, season/trend."""
    x = x_ref[...].astype(jnp.float32)                               # (T, L)
    reim = jnp.dot(x, bf_ref[...], preferred_element_type=jnp.float32)  # (T, W)
    sq = reim * reim
    freq2 = sq + pltpu.roll(sq, shift=half, axis=1)     # |X|^2 in BOTH halves

    grow = (pl.program_id(0) * tile_rows
            + jax.lax.broadcasted_iota(jnp.int32, (freq2.shape[0], 1), 0))
    freq2 = jnp.where(grow < rows_batch0, 0.0, freq2)

    thr = thr_ref[0, 0]                                 # squared threshold
    keep = (freq2 > thr).astype(jnp.float32)            # masks Re and Im lanes
    season = jnp.dot(reim * keep, bi_ref[...],
                     preferred_element_type=jnp.float32)             # (T, L)
    season_ref[...] = season.astype(season_ref.dtype)
    trend_ref[...] = (x - season).astype(trend_ref.dtype)


def dft_series_decomp(x, top_k=5):
    """x: (B, C, L) float -> (x_season, x_trend), each (B, C, L)."""
    B, C, L = x.shape
    R = B * C
    F = L // 2 + 1
    W = _round_up(2 * F, 128)          # packed Re/Im lane width
    half = W // 2

    itemsize = jnp.dtype(x.dtype).itemsize
    sub = {1: 32, 2: 16}.get(itemsize, 8)   # sublane multiple for x.dtype

    # Row-tile sizing: big enough to amortize per-grid-step overhead, bounded
    # by a conservative VMEM budget (double-buffered x/season/trend blocks +
    # (T, W) f32 in-kernel temporaries, safe for v7x's 32 MiB scoped limit),
    # and split into >= 2 tiles when possible so the "parallel" grid axis can
    # shard across v7x's two TensorCores.
    bytes_per_row = 2 * 3 * L * max(itemsize, 4) + 8 * W * 4
    vmem_budget = 12 * 1024 * 1024
    cap = max(sub, min(2048, vmem_budget // bytes_per_row) // sub * sub)
    R_sub = _round_up(R, sub)
    tile_rows = min(cap, R_sub)
    if tile_rows == R_sub and R_sub >= 2 * sub:
        tile_rows = _round_up(R_sub // 2, sub)
    R_pad = _round_up(R, tile_rows)
    n_tiles = R_pad // tile_rows

    Bf, Bi = _dft_bases_packed(L, F, W)

    # Native-dtype flattened view; pad rows only (never the lane dim L), and
    # only when R is not already a multiple of the row tile.
    x2 = x.reshape(R, L)
    if R_pad != R:
        x2 = jnp.pad(x2, ((0, R_pad - R), (0, 0)))

    parallel = pltpu.CompilerParams(dimension_semantics=("parallel",))

    # ---- Pass 1: per-tile min of per-row k-th largest squared magnitude ----
    kth_tiles = pl.pallas_call(
        functools.partial(_kth_kernel, top_k=top_k, half=half, rows_batch0=C,
                          total_rows=R, tile_rows=tile_rows),
        out_shape=jax.ShapeDtypeStruct((n_tiles * 8, 128), jnp.float32),
        grid=(n_tiles,),
        in_specs=[pl.BlockSpec((tile_rows, L), lambda i: (i, 0)),
                  pl.BlockSpec((L, W), lambda i: (0, 0))],
        out_specs=pl.BlockSpec((8, 128), lambda i: (i, 0)),
        compiler_params=parallel,
    )(x2, Bf)

    # Global threshold = min over row tiles (== top_k_freq.min(), squared).
    thr = jnp.min(kth_tiles).reshape(1, 1)

    # ---- Pass 2: mask spectrum, fused inverse DFT, season / trend ----------
    season_p, trend_p = pl.pallas_call(
        functools.partial(_decomp_kernel, half=half, rows_batch0=C,
                          tile_rows=tile_rows),
        out_shape=(jax.ShapeDtypeStruct((R_pad, L), x.dtype),
                   jax.ShapeDtypeStruct((R_pad, L), x.dtype)),
        grid=(n_tiles,),
        in_specs=[pl.BlockSpec(memory_space=pltpu.MemorySpace.SMEM),
                  pl.BlockSpec((tile_rows, L), lambda i: (i, 0)),
                  pl.BlockSpec((L, W), lambda i: (0, 0)),
                  pl.BlockSpec((W, L), lambda i: (0, 0))],
        out_specs=(pl.BlockSpec((tile_rows, L), lambda i: (i, 0)),
                   pl.BlockSpec((tile_rows, L), lambda i: (i, 0))),
        compiler_params=parallel,
    )(thr, x2, Bf, Bi)

    if R_pad != R:
        season_p = season_p[:R]
        trend_p = trend_p[:R]
    return season_p.reshape(B, C, L), trend_p.reshape(B, C, L)


def _reference(x, top_k=5):
    """Pure-JAX transcription of the PyTorch forward (for verification)."""
    xf = jnp.fft.rfft(x)
    freq = jnp.abs(xf)
    freq = freq.at[0].set(0.0)
    top_vals = jax.lax.top_k(freq, top_k)[0]
    thr = top_vals.min()
    xf = jnp.where(freq <= thr, jnp.zeros_like(xf), xf)
    season = jnp.fft.irfft(xf)
    return season.astype(x.dtype), (x - season).astype(x.dtype)


if __name__ == "__main__":
    key = jax.random.PRNGKey(0)
    B, C, L = 2, 4, 16   # batch=2, channels=4, seq length=16 (FFT axis)
    x = jax.random.normal(key, (B, C, L), dtype=jnp.float32)

    season, trend = jax.jit(dft_series_decomp)(x)
    jax.block_until_ready((season, trend))

    s_ref, t_ref = _reference(x)
    assert season.shape == (B, C, L) and trend.shape == (B, C, L)
    assert jnp.allclose(season, s_ref, atol=1e-4), float(jnp.max(jnp.abs(season - s_ref)))
    assert jnp.allclose(trend, t_ref, atol=1e-4), float(jnp.max(jnp.abs(trend - t_ref)))
    print("KERNEL_OK")
</pallas_src>

<mosaic_0001>
module attributes {stable_mosaic.version = 11 : i64} {
  func.func @_kth_kernel(%arg0: i32, %arg1: memref<8x16xf32, #tpu.memory_space<vmem>>, %arg2: memref<16x128xf32, #tpu.memory_space<vmem>>, %arg3: memref<8x128xf32, #tpu.memory_space<vmem>>) attributes {dimension_semantics = [#tpu.dimension_semantics<parallel>], iteration_bounds = array<i64: 1>, scalar_prefetch = 0 : i64, scratch_operands = 0 : i64, tpu.core_type = #tpu.core_type<tc>, window_params = [{transform_indices = @transform_0, window_bounds = array<i64: 8, 16>}, {pipeline_mode = #tpu.pipeline_mode<synchronous>, transform_indices = @transform_1, window_bounds = array<i64: 16, 128>}, {transform_indices = @transform_2, window_bounds = array<i64: 8, 128>}]} {
    %c0 = arith.constant 0 : index
    %c0_0 = arith.constant 0 : index
    %0 = vector.load %arg1[%c0, %c0_0] : memref<8x16xf32, #tpu.memory_space<vmem>>, vector<8x16xf32>
    %c0_1 = arith.constant 0 : index
    %c0_2 = arith.constant 0 : index
    %1 = vector.load %arg2[%c0_1, %c0_2] : memref<16x128xf32, #tpu.memory_space<vmem>>, vector<16x128xf32>
    %cst = arith.constant dense<0.000000e+00> : vector<8x128xf32>
    %2 = tpu.matmul %0, %1, %cst {dimension_numbers = #tpu.dot_dimension_numbers<[1], [0], [0], [1], [0, 0, 1, 1], [], []>} : vector<8x16xf32>, vector<16x128xf32>, vector<8x128xf32> -> vector<8x128xf32>
    %3 = arith.mulf %2, %2 : vector<8x128xf32>
    %c64_i32 = arith.constant 64 : i32
    %4 = tpu.dynamic_rotate %3 by %c64_i32 dim 1 : vector<8x128xf32>, i32 -> vector<8x128xf32>
    %5 = arith.addf %3, %4 : vector<8x128xf32>
    %6 = tpu.iota {dimensions = array<i32: 1>} : vector<8x128xi32>
    %c8_i32 = arith.constant 8 : i32
    %7 = arith.muli %arg0, %c8_i32 : i32
    %8 = tpu.iota {dimensions = array<i32: 0>} : vector<8x1xi32>
    %9 = vector.broadcast %7 : i32 to vector<8x1xi32>
    %10 = arith.addi %9, %8 : vector<8x1xi32>
    %c64_i32_3 = arith.constant 64 : i32
    %11 = vector.broadcast %c64_i32_3 : i32 to vector<8x128xi32>
    %12 = arith.cmpi slt, %6, %11 : vector<8x128xi32>
    %c4_i32 = arith.constant 4 : i32
    %13 = vector.broadcast %c4_i32 : i32 to vector<8x1xi32>
    %14 = arith.cmpi sge, %10, %13 : vector<8x1xi32>
    %15 = vector.broadcast %14 : vector<8x1xi1> to vector<8x128xi1>
    %16 = arith.andi %12, %15 : vector<8x128xi1>
    %cst_4 = arith.constant 0.000000e+00 : f32
    %17 = vector.broadcast %cst_4 : f32 to vector<8x128xf32>
    %18 = arith.select %16, %5, %17 : vector<8x128xi1>, vector<8x128xf32>
    %cst_5 = arith.constant dense<0xFF800000> : vector<8xf32>
    %19 = vector.multi_reduction <maximumf>, %18, %cst_5 [1] : vector<8x128xf32> to vector<8xf32>
    %20 = vector.shape_cast %19 : vector<8xf32> to vector<8x1xf32>
    %21 = vector.broadcast %20 : vector<8x1xf32> to vector<8x128xf32>
    %22 = arith.cmpf oeq, %18, %21 : vector<8x128xf32>
    %c128_i32 = arith.constant 128 : i32
    %23 = vector.broadcast %c128_i32 : i32 to vector<8x128xi32>
    %24 = arith.select %22, %6, %23 : vector<8x128xi1>, vector<8x128xi32>
    %cst_6 = arith.constant dense<2147483647> : vector<8xi32>
    %25 = vector.multi_reduction <minsi>, %24, %cst_6 [1] : vector<8x128xi32> to vector<8xi32>
    %26 = vector.shape_cast %25 : vector<8xi32> to vector<8x1xi32>
    %27 = vector.broadcast %26 : vector<8x1xi32> to vector<8x128xi32>
    %28 = arith.cmpi eq, %6, %27 : vector<8x128xi32>
    %cst_7 = arith.constant -1.000000e+00 : f32
    %29 = vector.broadcast %cst_7 : f32 to vector<8x128xf32>
    %30 = arith.select %28, %29, %18 : vector<8x128xi1>, vector<8x128xf32>
    %cst_8 = arith.constant dense<0xFF800000> : vector<8xf32>
    %31 = vector.multi_reduction <maximumf>, %30, %cst_8 [1] : vector<8x128xf32> to vector<8xf32>
    %32 = vector.shape_cast %31 : vector<8xf32> to vector<8x1xf32>
    %33 = vector.broadcast %32 : vector<8x1xf32> to vector<8x128xf32>
    %34 = arith.cmpf oeq, %30, %33 : vector<8x128xf32>
    %c128_i32_9 = arith.constant 128 : i32
    %35 = vector.broadcast %c128_i32_9 : i32 to vector<8x128xi32>
    %36 = arith.select %34, %6, %35 : vector<8x128xi1>, vector<8x128xi32>
    %cst_10 = arith.constant dense<2147483647> : vector<8xi32>
    %37 = vector.multi_reduction <minsi>, %36, %cst_10 [1] : vector<8x128xi32> to vector<8xi32>
    %38 = vector.shape_cast %37 : vector<8xi32> to vector<8x1xi32>
    %39 = vector.broadcast %38 : vector<8x1xi32> to vector<8x128xi32>
    %40 = arith.cmpi eq, %6, %39 : vector<8x128xi32>
    %cst_11 = arith.constant -1.000000e+00 : f32
    %41 = vector.broadcast %cst_11 : f32 to vector<8x128xf32>
    %42 = arith.select %40, %41, %30 : vector<8x128xi1>, vector<8x128xf32>
    %cst_12 = arith.constant dense<0xFF800000> : vector<8xf32>
    %43 = vector.multi_reduction <maximumf>, %42, %cst_12 [1] : vector<8x128xf32> to vector<8xf32>
    %44 = vector.shape_cast %43 : vector<8xf32> to vector<8x1xf32>
    %45 = vector.broadcast %44 : vector<8x1xf32> to vector<8x128xf32>
    %46 = arith.cmpf oeq, %42, %45 : vector<8x128xf32>
    %c128_i32_13 = arith.constant 128 : i32
    %47 = vector.broadcast %c128_i32_13 : i32 to vector<8x128xi32>
    %48 = arith.select %46, %6, %47 : vector<8x128xi1>, vector<8x128xi32>
    %cst_14 = arith.constant dense<2147483647> : vector<8xi32>
    %49 = vector.multi_reduction <minsi>, %48, %cst_14 [1] : vector<8x128xi32> to vector<8xi32>
    %50 = vector.shape_cast %49 : vector<8xi32> to vector<8x1xi32>
    %51 = vector.broadcast %50 : vector<8x1xi32> to vector<8x128xi32>
    %52 = arith.cmpi eq, %6, %51 : vector<8x128xi32>
    %cst_15 = arith.constant -1.000000e+00 : f32
    %53 = vector.broadcast %cst_15 : f32 to vector<8x128xf32>
    %54 = arith.select %52, %53, %42 : vector<8x128xi1>, vector<8x128xf32>
    %cst_16 = arith.constant dense<0xFF800000> : vector<8xf32>
    %55 = vector.multi_reduction <maximumf>, %54, %cst_16 [1] : vector<8x128xf32> to vector<8xf32>
    %56 = vector.shape_cast %55 : vector<8xf32> to vector<8x1xf32>
    %57 = vector.broadcast %56 : vector<8x1xf32> to vector<8x128xf32>
    %58 = arith.cmpf oeq, %54, %57 : vector<8x128xf32>
    %c128_i32_17 = arith.constant 128 : i32
    %59 = vector.broadcast %c128_i32_17 : i32 to vector<8x128xi32>
    %60 = arith.select %58, %6, %59 : vector<8x128xi1>, vector<8x128xi32>
    %cst_18 = arith.constant dense<2147483647> : vector<8xi32>
    %61 = vector.multi_reduction <minsi>, %60, %cst_18 [1] : vector<8x128xi32> to vector<8xi32>
    %62 = vector.shape_cast %61 : vector<8xi32> to vector<8x1xi32>
    %63 = vector.broadcast %62 : vector<8x1xi32> to vector<8x128xi32>
    %64 = arith.cmpi eq, %6, %63 : vector<8x128xi32>
    %cst_19 = arith.constant -1.000000e+00 : f32
    %65 = vector.broadcast %cst_19 : f32 to vector<8x128xf32>
    %66 = arith.select %64, %65, %54 : vector<8x128xi1>, vector<8x128xf32>
    %cst_20 = arith.constant dense<0xFF800000> : vector<8xf32>
    %67 = vector.multi_reduction <maximumf>, %66, %cst_20 [1] : vector<8x128xf32> to vector<8xf32>
    %68 = vector.shape_cast %67 : vector<8xf32> to vector<8x1xf32>
    %c8_i32_21 = arith.constant 8 : i32
    %69 = vector.broadcast %c8_i32_21 : i32 to vector<8x1xi32>
    %70 = arith.cmpi slt, %10, %69 : vector<8x1xi32>
    %cst_22 = arith.constant 0x7F800000 : f32
    %71 = vector.broadcast %cst_22 : f32 to vector<8x1xf32>
    %72 = arith.select %70, %68, %71 : vector<8x1xi1>, vector<8x1xf32>
    %cst_23 = arith.constant dense<0x7F800000> : vector<1xf32>
    %73 = vector.multi_reduction <minimumf>, %72, %cst_23 [0] : vector<8x1xf32> to vector<1xf32>
    %74 = vector.shape_cast %73 : vector<1xf32> to vector<1x1xf32>
    %75 = vector.shape_cast %74 : vector<1x1xf32> to vector<1x1xf32>
    %76 = vector.broadcast %75 : vector<1x1xf32> to vector<8x128xf32>
    %c0_24 = arith.constant 0 : index
    %c0_25 = arith.constant 0 : index
    %77 = vector.load %arg3[%c0_24, %c0_25] : memref<8x128xf32, #tpu.memory_space<vmem>>, vector<8x128xf32>
    tpu.vector_store %arg3[%c0_24, %c0_25], %76 {strides = array<i32>} : memref<8x128xf32, #tpu.memory_space<vmem>>, vector<8x128xf32>,
    return
  }
  func.func @transform_0(%arg0: i32) -> (i32, i32) {
    %c0_i32 = arith.constant 0 : i32
    %c0_i32_0 = arith.constant 0 : i32
    return %arg0, %c0_i32 : i32, i32
  }
  func.func @transform_1(%arg0: i32) -> (i32, i32) {
    %c0_i32 = arith.constant 0 : i32
    %c0_i32_0 = arith.constant 0 : i32
    %c0_i32_1 = arith.constant 0 : i32
    return %c0_i32, %c0_i32_0 : i32, i32
  }
  func.func @transform_2(%arg0: i32) -> (i32, i32) {
    %c0_i32 = arith.constant 0 : i32
    %c0_i32_0 = arith.constant 0 : i32
    return %arg0, %c0_i32 : i32, i32
  }
}

module attributes {stable_mosaic.version = 11 : i64} {
  func.func @_decomp_kernel(%arg0: i32, %arg1: memref<1x1xf32, #tpu.memory_space<smem>>, %arg2: memref<8x16xf32, #tpu.memory_space<vmem>>, %arg3: memref<16x128xf32, #tpu.memory_space<vmem>>, %arg4: memref<128x16xf32, #tpu.memory_space<vmem>>, %arg5: memref<8x16xf32, #tpu.memory_space<vmem>>, %arg6: memref<8x16xf32, #tpu.memory_space<vmem>>) attributes {dimension_semantics = [#tpu.dimension_semantics<parallel>], iteration_bounds = array<i64: 1>, scalar_prefetch = 0 : i64, scratch_operands = 0 : i64, tpu.core_type = #tpu.core_type<tc>, window_params = [{transform_indices = @transform_0, window_bounds = array<i64: 1, 1>}, {transform_indices = @transform_1, window_bounds = array<i64: 8, 16>}, {pipeline_mode = #tpu.pipeline_mode<synchronous>, transform_indices = @transform_2, window_bounds = array<i64: 16, 128>}, {pipeline_mode = #tpu.pipeline_mode<synchronous>, transform_indices = @transform_3, window_bounds = array<i64: 128, 16>}, {transform_indices = @transform_4, window_bounds = array<i64: 8, 16>}, {transform_indices = @transform_5, window_bounds = array<i64: 8, 16>}]} {
    %c0 = arith.constant 0 : index
    %c0_0 = arith.constant 0 : index
    %0 = vector.load %arg2[%c0, %c0_0] : memref<8x16xf32, #tpu.memory_space<vmem>>, vector<8x16xf32>
    %c0_1 = arith.constant 0 : index
    %c0_2 = arith.constant 0 : index
    %1 = vector.load %arg3[%c0_1, %c0_2] : memref<16x128xf32, #tpu.memory_space<vmem>>, vector<16x128xf32>
    %cst = arith.constant dense<0.000000e+00> : vector<8x128xf32>
    %2 = tpu.matmul %0, %1, %cst {dimension_numbers = #tpu.dot_dimension_numbers<[1], [0], [0], [1], [0, 0, 1, 1], [], []>} : vector<8x16xf32>, vector<16x128xf32>, vector<8x128xf32> -> vector<8x128xf32>
    %3 = arith.mulf %2, %2 : vector<8x128xf32>
    %c64_i32 = arith.constant 64 : i32
    %4 = tpu.dynamic_rotate %3 by %c64_i32 dim 1 : vector<8x128xf32>, i32 -> vector<8x128xf32>
    %5 = arith.addf %3, %4 : vector<8x128xf32>
    %c8_i32 = arith.constant 8 : i32
    %6 = arith.muli %arg0, %c8_i32 : i32
    %7 = tpu.iota {dimensions = array<i32: 0>} : vector<8x1xi32>
    %8 = vector.broadcast %6 : i32 to vector<8x1xi32>
    %9 = arith.addi %8, %7 : vector<8x1xi32>
    %c4_i32 = arith.constant 4 : i32
    %10 = vector.broadcast %c4_i32 : i32 to vector<8x1xi32>
    %11 = arith.cmpi slt, %9, %10 : vector<8x1xi32>
    %cst_3 = arith.constant 0.000000e+00 : f32
    %12 = vector.shape_cast %11 : vector<8x1xi1> to vector<8x1xi1>
    %13 = vector.broadcast %12 : vector<8x1xi1> to vector<8x128xi1>
    %14 = vector.broadcast %cst_3 : f32 to vector<8x128xf32>
    %15 = arith.select %13, %14, %5 : vector<8x128xi1>, vector<8x128xf32>
    %c0_4 = arith.constant 0 : index
    %c0_5 = arith.constant 0 : index
    %16 = memref.load %arg1[%c0_4, %c0_5] : memref<1x1xf32, #tpu.memory_space<smem>>
    %17 = vector.broadcast %16 : f32 to vector<8x128xf32>
    %18 = arith.cmpf ogt, %15, %17 : vector<8x128xf32>
    %19 = arith.extui %18 : vector<8x128xi1> to vector<8x128xi32>
    %20 = arith.sitofp %19 : vector<8x128xi32> to vector<8x128xf32>
    %21 = arith.mulf %2, %20 : vector<8x128xf32>
    %c0_6 = arith.constant 0 : index
    %c0_7 = arith.constant 0 : index
    %22 = vector.load %arg4[%c0_6, %c0_7] : memref<128x16xf32, #tpu.memory_space<vmem>>, vector<128x16xf32>
    %cst_8 = arith.constant dense<0.000000e+00> : vector<8x16xf32>
    %23 = tpu.matmul %21, %22, %cst_8 {dimension_numbers = #tpu.dot_dimension_numbers<[1], [0], [0], [1], [0, 0, 1, 1], [], []>} : vector<8x128xf32>, vector<128x16xf32>, vector<8x16xf32> -> vector<8x16xf32>
    %c0_9 = arith.constant 0 : index
    %c0_10 = arith.constant 0 : index
    %24 = vector.load %arg5[%c0_9, %c0_10] : memref<8x16xf32, #tpu.memory_space<vmem>>, vector<8x16xf32>
    tpu.vector_store %arg5[%c0_9, %c0_10], %23 {strides = array<i32>} : memref<8x16xf32, #tpu.memory_space<vmem>>, vector<8x16xf32>,
    %25 = arith.subf %0, %23 : vector<8x16xf32>
    %c0_11 = arith.constant 0 : index
    %c0_12 = arith.constant 0 : index
    %26 = vector.load %arg6[%c0_11, %c0_12] : memref<8x16xf32, #tpu.memory_space<vmem>>, vector<8x16xf32>
    tpu.vector_store %arg6[%c0_11, %c0_12], %25 {strides = array<i32>} : memref<8x16xf32, #tpu.memory_space<vmem>>, vector<8x16xf32>,
    return
  }
  func.func @transform_0(%arg0: i32) -> (i32, i32) {
    %c0_i32 = arith.constant 0 : i32
    %c0_i32_0 = arith.constant 0 : i32
    %c0_i32_1 = arith.constant 0 : i32
    return %c0_i32, %c0_i32_0 : i32, i32
  }
  func.func @transform_1(%arg0: i32) -> (i32, i32) {
    %c0_i32 = arith.constant 0 : i32
    %c0_i32_0 = arith.constant 0 : i32
    return %arg0, %c0_i32 : i32, i32
  }
  func.func @transform_2(%arg0: i32) -> (i32, i32) {
    %c0_i32 = arith.constant 0 : i32
    %c0_i32_0 = arith.constant 0 : i32
    %c0_i32_1 = arith.constant 0 : i32
    return %c0_i32, %c0_i32_0 : i32, i32
  }
  func.func @transform_3(%arg0: i32) -> (i32, i32) {
    %c0_i32 = arith.constant 0 : i32
    %c0_i32_0 = arith.constant 0 : i32
    %c0_i32_1 = arith.constant 0 : i32
    return %c0_i32, %c0_i32_0 : i32, i32
  }
  func.func @transform_4(%arg0: i32) -> (i32, i32) {
    %c0_i32 = arith.constant 0 : i32
    %c0_i32_0 = arith.constant 0 : i32
    return %arg0, %c0_i32 : i32, i32
  }
  func.func @transform_5(%arg0: i32) -> (i32, i32) {
    %c0_i32 = arith.constant 0 : i32
    %c0_i32_0 = arith.constant 0 : i32
    return %arg0, %c0_i32 : i32, i32
  }
}

</mosaic_0001>

<llo_original>
// kernel: dft_series_decomp.2
$region0: #{dft_series_decomp.2}
  #allocation0 [shape = 'u32[]', space=smem, size = 0x4, offset = 0x4, fixed_abs, tag = 'smem constant byte address 0x4 - core index']
  #allocation1 [shape = 'u32[144,128]{1,0:T(1,128)}', space=vmem, size = 0x12000, scoped, tag = 'internal scratch']
  %s0 = inlined_call_operand.hbm [shape: f32[8,16], index: 0, kind: input, shape index: {}]
  %s1 = inlined_call_operand.hbm [shape: f32[16,128], index: 1, kind: input, shape index: {}]
  %s2 = inlined_call_operand.vmem [shape: f32[8,128], index: 2, kind: output, shape index: {}]
  %s3 = sld [smem:[#allocation0]]
  $region26: #{dft_series_decomp.2} parent=0
    _
  %s5 = ssub.s32 1, %s3
  %s6 = scalar_select 0, %s5, %s3
  $region1: #{dft_series_decomp.2} parent=0
    #allocation2 [shape = 'u8[4096]{0}', space=vmem, size = 0x1000, scoped, tag = 'input window, operand 0, single buffered']
    #allocation3 [shape = 's32[1]{0}', space=sflag, size = 0x4, scoped, tag = 'scoped memory for dft_series_decomp.2']
    #allocation4 [shape = 'u8[8192]{0}', space=vmem, size = 0x2000, scoped, tag = 'input window, operand 1, single buffered']
    #allocation5 [shape = 's32[1]{0}', space=sflag, size = 0x4, scoped, tag = 'scoped memory for dft_series_decomp.2']
    %7 = vsyncpa [#allocation3], 0
    %8 = vsyncpa [#allocation5], 0
    // Predicated region
    $region2: #{dft_series_decomp.2} parent=1 // pred_check
      _
    $region3: #{dft_series_decomp.2} parent=1 // pred_check_branch
      %10 = sbr.rel (0) target = $region5
    $region4: #{dft_series_decomp.2} parent=1 // pred_region
      %s12 = ssub.s32 128, 128
      %13 = vsyncadd [#allocation3], %s12
      %s15 = sshll.u32 [#allocation2], 4
      %s16 = int_to_ptr.vmem [resolvable:$true] %s15
      %18 = dma.hbm_to_vmem [thread:$0]  %s0, 128, %s16, [#allocation3]
    $region5: #{dft_series_decomp.2} parent=1 // pred_fallthru
      _
    // Predicated region
    $region6: #{dft_series_decomp.2} parent=1 // pred_check
      _
    $region7: #{dft_series_decomp.2} parent=1 // pred_check_branch
      %20 = sbr.rel (0) target = $region9
    $region8: #{dft_series_decomp.2} parent=1 // pred_region
      %s22 = ssub.s32 256, 256
      %23 = vsyncadd [#allocation5], %s22
      %s24 = sshll.u32 [#allocation4], 4
      %s25 = int_to_ptr.vmem [resolvable:$true] %s24
      %30 = dma.hbm_to_vmem [thread:$0]  %s1, 256, %s25, [#allocation5], 128, 128, 8
    $region9: #{dft_series_decomp.2} parent=1 // pred_fallthru
      _
    // Predicated region
    $region10: #{dft_series_decomp.2} parent=1 // pred_check
      _
    $region11: #{dft_series_decomp.2} parent=1 // pred_check_branch
      %32 = sbr.rel (0) target = $region13
    $region12: #{dft_series_decomp.2} parent=1 // pred_region
      %33 = dma.done [#allocation3], 128
    $region13: #{dft_series_decomp.2} parent=1 // pred_fallthru
      _
    // Predicated region
    $region14: #{dft_series_decomp.2} parent=1 // pred_check
      _
    $region15: #{dft_series_decomp.2} parent=1 // pred_check_branch
      %35 = sbr.rel (0) target = $region17
    $region16: #{dft_series_decomp.2} parent=1 // pred_region
      %36 = dma.done [#allocation5], 256
    $region17: #{dft_series_decomp.2} parent=1 // pred_fallthru
      _
    %v37 = vld [vmem:[#allocation2] sm:$0xff]
    %v38 = vld [vmem:[#allocation4] sm:$0xff]
    %v39 = vld [vmem:[#allocation4 + $0x8] sm:$0xff]
    %vm40 = vcmask 130048
    %v42 = vsel %vm40, %v37, 0
    %44 = vmatprep.subr.mxu0 0.0
    %45 = vmatpush1.msra.mxu0 %v38
    %46 = vmatprep.subr.mxu0 0.0
    %47 = vmatpush1.msra.mxu0 %v39
    %48 = vmatprep.subr.mxu0 0.0
    %49 = vmatpush1.msra.mxu0 0.0
    %50 = vmatprep.subr.mxu0 0.0
    %51 = vmatpush1.msra.mxu0 0.0
    %52 = vmatprep.subr.mxu0 0.0
    %53 = vmatpush1.msra.mxu0 0.0
    %54 = vmatprep.subr.mxu0 0.0
    %55 = vmatpush1.msra.mxu0 0.0
    %56 = vmatprep.subr.mxu0 0.0
    %57 = vmatpush1.msra.mxu0 0.0
    %58 = vmatprep.subr.mxu0 0.0
    %59 = vmatpush1.msra.mxu0 0.0
    %60 = vmatprep.subr.mxu0 0.0
    %61 = vmatpush1.msra.mxu0 0.0
    %62 = vmatprep.subr.mxu0 0.0
    %63 = vmatpush1.msra.mxu0 0.0
    %64 = vmatprep.subr.mxu0 0.0
    %65 = vmatpush1.msra.mxu0 0.0
    %66 = vmatprep.subr.mxu0 0.0
    %67 = vmatpush1.msra.mxu0 0.0
    %68 = vmatprep.subr.mxu0 0.0
    %69 = vmatpush1.msra.mxu0 0.0
    %70 = vmatprep.subr.mxu0 0.0
    %71 = vmatpush1.msra.mxu0 0.0
    %72 = vmatprep.subr.mxu0 0.0
    %73 = vmatpush1.msra.mxu0 0.0
    %74 = vmatprep.subr.mxu0 0.0
    %75 = vmatpush1.msra.mxu0 0.0
    %76 = vmatprep.subr.mxu0 0.0
    %77 = vmatpush1.msra.mxu0 0.0
    %78 = vmatprep.subr.mxu0 0.0
    %79 = vmatpush1.msra.mxu0 0.0
    %80 = vmatprep.subr.mxu0 0.0
    %81 = vmatpush1.msra.mxu0 0.0
    %82 = vmatprep.subr.mxu0 0.0
    %83 = vmatpush1.msra.mxu0 0.0
    %84 = vmatprep.subr.mxu0 0.0
    %85 = vmatpush1.msra.mxu0 0.0
    %86 = vmatprep.subr.mxu0 0.0
    %87 = vmatpush1.msra.mxu0 0.0
    %88 = vmatprep.subr.mxu0 0.0
    %89 = vmatpush1.msra.mxu0 0.0
    %90 = vmatprep.subr.mxu0 0.0
    %91 = vmatpush1.msra.mxu0 0.0
    %92 = vmatprep.subr.mxu0 0.0
    %93 = vmatpush1.msra.mxu0 0.0
    %94 = vmatprep.subr.mxu0 0.0
    %95 = vmatpush1.msra.mxu0 0.0
    %96 = vmatprep.subr.mxu0 0.0
    %97 = vmatpush1.msra.mxu0 0.0
    %98 = vmatprep.subr.mxu0 0.0
    %99 = vmatpush1.msra.mxu0 0.0
    %100 = vmatprep.subr.mxu0 0.0
    %101 = vmatpush1.msra.mxu0 0.0
    %102 = vmatprep.subr.mxu0 0.0
    %103 = vmatpush1.msra.mxu0 0.0
    %104 = vmatprep.subr.mxu0 0.0
    %105 = vmatpush1.msra.mxu0 0.0
    %106 = vmatprep.subr.mxu0 0.0
    %107 = vmatpush1.msra.mxu0 0.0
    %108 = vmatprep.mubr.f32.mxu0 0.0
    %109 = vmatmul.mubr.f32.gmra.mrb[0].mxu0 %v42
    %v110 = vpop.f32.mrb[0].mxu0
    %v111 = vadd.f32 0.0, %v110
    %v112 = vpop.f32.mrb[0].mxu0
    %113 = vdwg.mxu0
    %v114 = vmul.f32 %v111, %v111
    %115 = vrot.lane.b32.xlu0 %v114, 64
    %v116 = vpop.permute.xlu0 %115
    %v117 = vadd.f32 %v114, %v116
    %v118 = vlaneseq
    %v119 = vand.u32 %v118, 127
    %s120 = smul.u32 0, 8
    %v121 = vlaneseq
    %v122 = vshrl.u32 %v121, 7
    %v123 = vstv %s120
    %v124 = vadd.s32 %v123, %v122
    %vm125 = vcmp.lt.s32.totalorder %v119, 64
    %vm126 = vcmp.ge.s32.totalorder %v124, 4
    %v127 = vsel %vm126, 1, 0
    %vm128 = vcmp.eq.s32.totalorder %v127, 1
    %vm129 = vmand %vm125, %vm128
    %v130 = vsel %vm129, %v117, 0.0
    %131 = vmax.xlane.f32.xlu0 %v130
    %v132 = vpop.xlane.xlu0 %131
    %vm133 = vcmp.eq.f32.partialorder %v130, %v132
    %v134 = vsel %vm133, %v119, 128
    %v135 = vand.u32 %v134, 65535
    %v136 = vshra.s32 %v134, 16
    %v137 = vcvt.s32.f32 %v135
    %v138 = vcvt.s32.f32 %v136
    %139 = vmin.xlane.f32.xlu0 %v138
    %v140 = vpop.xlane.xlu0 %139
    %vm141 = vcmp.eq.f32.partialorder %v138, %v140
    %v142 = vsel %vm141, %v137, inf
    %143 = vmin.xlane.f32.xlu0 %v142
    %v144 = vpop.xlane.xlu0 %143
    %v145 = vcvt.f32.s32 %v144
    %v146 = vcvt.f32.s32 %v140
    %v147 = vshll.u32 %v146, 16
    %v148 = vadd.s32 %v147, %v145
    %vm149 = vcmp.eq.s32.totalorder %v119, %v148
    %v150 = vsel %vm149, -1.0, %v130
    %151 = vmax.xlane.f32.xlu0 %v150
    %v152 = vpop.xlane.xlu0 %151
    %vm153 = vcmp.eq.f32.partialorder %v150, %v152
    %v154 = vsel %vm153, %v119, 128
    %v155 = vand.u32 %v154, 65535
    %v156 = vshra.s32 %v154, 16
    %v157 = vcvt.s32.f32 %v155
    %v158 = vcvt.s32.f32 %v156
    %159 = vmin.xlane.f32.xlu0 %v158
    %v160 = vpop.xlane.xlu0 %159
    %vm161 = vcmp.eq.f32.partialorder %v158, %v160
    %v162 = vsel %vm161, %v157, inf
    %163 = vmin.xlane.f32.xlu0 %v162
    %v164 = vpop.xlane.xlu0 %163
    %v165 = vcvt.f32.s32 %v164
    %v166 = vcvt.f32.s32 %v160
    %v167 = vshll.u32 %v166, 16
    %v168 = vadd.s32 %v167, %v165
    %vm169 = vcmp.eq.s32.totalorder %v119, %v168
    %v170 = vsel %vm169, -1.0, %v150
    %171 = vmax.xlane.f32.xlu0 %v170
    %v172 = vpop.xlane.xlu0 %171
    %vm173 = vcmp.eq.f32.partialorder %v170, %v172
    %v174 = vsel %vm173, %v119, 128
    %v175 = vand.u32 %v174, 65535
    %v176 = vshra.s32 %v174, 16
    %v177 = vcvt.s32.f32 %v175
    %v178 = vcvt.s32.f32 %v176
    %179 = vmin.xlane.f32.xlu0 %v178
    %v180 = vpop.xlane.xlu0 %179
    %vm181 = vcmp.eq.f32.partialorder %v178, %v180
    %v182 = vsel %vm181, %v177, inf
    %183 = vmin.xlane.f32.xlu0 %v182
    %v184 = vpop.xlane.xlu0 %183
    %v185 = vcvt.f32.s32 %v184
    %v186 = vcvt.f32.s32 %v180
    %v187 = vshll.u32 %v186, 16
    %v188 = vadd.s32 %v187, %v185
    %vm189 = vcmp.eq.s32.totalorder %v119, %v188
    %v190 = vsel %vm189, -1.0, %v170
    %191 = vmax.xlane.f32.xlu0 %v190
    %v192 = vpop.xlane.xlu0 %191
    %vm193 = vcmp.eq.f32.partialorder %v190, %v192
    %v194 = vsel %vm193, %v119, 128
    %v195 = vand.u32 %v194, 65535
    %v196 = vshra.s32 %v194, 16
    %v197 = vcvt.s32.f32 %v195
    %v198 = vcvt.s32.f32 %v196
    %199 = vmin.xlane.f32.xlu0 %v198
    %v200 = vpop.xlane.xlu0 %199
    %vm201 = vcmp.eq.f32.partialorder %v198, %v200
    %v202 = vsel %vm201, %v197, inf
    %203 = vmin.xlane.f32.xlu0 %v202
    %v204 = vpop.xlane.xlu0 %203
    %v205 = vcvt.f32.s32 %v204
    %v206 = vcvt.f32.s32 %v200
    %v207 = vshll.u32 %v206, 16
    %v208 = vadd.s32 %v207, %v205
    %vm209 = vcmp.eq.s32.totalorder %v119, %v208
    %v210 = vsel %vm209, -1.0, %v190
    %211 = vmax.xlane.f32.xlu0 %v210
    %v212 = vpop.xlane.xlu0 %211
    %vm213 = vcmp.lt.s32.totalorder %v124, 8
    %v214 = vsel %vm213, %v212, inf
    %v215 = vrot.slane %v214, 4
    %v216 = vmin.f32 %v214, %v215
    %v217 = vrot.slane %v216, 2
    %v218 = vmin.f32 %v216, %v217
    %v219 = vrot.slane %v218, 1
    %v220 = vmin.f32 %v218, %v219
    %221 = vst [vmem:[%s2] sm:$0xff] %v220
    // Predicated region
    $region18: #{dft_series_decomp.2} parent=1 // pred_check
      _
    $region19: #{dft_series_decomp.2} parent=1 // pred_check_branch
      %223 = sbr.rel (0) target = $region21
    $region20: #{dft_series_decomp.2} parent=1 // pred_region
      _
    $region21: #{dft_series_decomp.2} parent=1 // pred_fallthru
      _
    // Predicated region
    $region22: #{dft_series_decomp.2} parent=1 // pred_check
      _
    $region23: #{dft_series_decomp.2} parent=1 // pred_check_branch
      %225 = sbr.rel (0) target = $region25
    $region24: #{dft_series_decomp.2} parent=1 // pred_region
      _
    $region25: #{dft_series_decomp.2} parent=1 // pred_fallthru
      _
    %226 = vsyncpa [#allocation3], 1
    %227 = vsyncpa [#allocation5], 1

// kernel: dft_series_decomp.3
$region0: #{dft_series_decomp.3}
  #allocation0 [shape = 'u32[]', space=smem, size = 0x4, offset = 0x4, fixed_abs, tag = 'smem constant byte address 0x4 - core index']
  #allocation1 [shape = 'u32[144,128]{1,0:T(1,128)}', space=vmem, size = 0x12000, scoped, tag = 'internal scratch']
  #allocation2 [shape = 'f32[1,1]{1,0:T(1,128)S(6)}', space=smem, size = 0x200, scoped, tag = 'scoped memory for dft_series_decomp.3']
  %s0 = inlined_call_operand.<no memory space> [shape: f32[1,1], index: 0, kind: input, shape index: {}]
  %s1 = inlined_call_operand.vmem [shape: f32[8,16], index: 1, kind: input, shape index: {}]
  %s2 = inlined_call_operand.vmem [shape: f32[16,128], index: 2, kind: input, shape index: {}]
  %s3 = inlined_call_operand.hbm [shape: f32[128,16], index: 3, kind: input, shape index: {}]
  %s4 = inlined_call_operand.hbm [shape: f32[8,16], index: 4, kind: output, shape index: {0}]
  %s5 = inlined_call_operand.hbm [shape: f32[8,16], index: 5, kind: output, shape index: {1}]
  %6 = xla_tuple %s4, %s5
  %s7 = sld [smem:[#allocation0]]
  $region38: #{dft_series_decomp.3} parent=0
    _
  %s9 = ssub.s32 1, %s7
  %s10 = scalar_select 0, %s9, %s7
  %11 = sst [smem:[#allocation2]] %s0
  $region1: #{dft_series_decomp.3} parent=0
    #allocation3 [shape = 'u8[65536]{0}', space=vmem, size = 0x10000, scoped, tag = 'input window, operand 3, single buffered']
    #allocation4 [shape = 's32[1]{0}', space=sflag, size = 0x4, scoped, tag = 'scoped memory for dft_series_decomp.3']
    #allocation5 [shape = 's32[1]{0}', space=sflag, size = 0x4, scoped, tag = 'scoped memory for dft_series_decomp.3']
    #allocation6 [shape = 'u8[4096]{0}', space=vmem, size = 0x1000, scoped, tag = 'output window, operand 0, single buffered']
    #allocation7 [shape = 'u8[4096]{0}', space=vmem, size = 0x1000, scoped, tag = 'output window, operand 1, single buffered']
    #allocation8 [shape = 's32[1]{0}', space=sflag, size = 0x4, scoped, tag = 'scoped memory for dft_series_decomp.3']
    %12 = vsyncpa [#allocation4], 0
    %13 = vsyncpa [#allocation5], 0
    %14 = vsyncpa [#allocation8], 0
    // Predicated region
    $region2: #{dft_series_decomp.3} parent=1 // pred_check
      _
    $region3: #{dft_series_decomp.3} parent=1 // pred_check_branch
      %16 = sbr.rel (0) target = $region5
    $region4: #{dft_series_decomp.3} parent=1 // pred_region
      _
    $region5: #{dft_series_decomp.3} parent=1 // pred_fallthru
      _
    // Predicated region
    $region6: #{dft_series_decomp.3} parent=1 // pred_check
      _
    $region7: #{dft_series_decomp.3} parent=1 // pred_check_branch
      %18 = sbr.rel (0) target = $region9
    $region8: #{dft_series_decomp.3} parent=1 // pred_region
      _
    $region9: #{dft_series_decomp.3} parent=1 // pred_fallthru
      _
    // Predicated region
    $region10: #{dft_series_decomp.3} parent=1 // pred_check
      _
    $region11: #{dft_series_decomp.3} parent=1 // pred_check_branch
      %20 = sbr.rel (0) target = $region13
    $region12: #{dft_series_decomp.3} parent=1 // pred_region
      _
    $region13: #{dft_series_decomp.3} parent=1 // pred_fallthru
      _
    // Predicated region
    $region14: #{dft_series_decomp.3} parent=1 // pred_check
      _
    $region15: #{dft_series_decomp.3} parent=1 // pred_check_branch
      %22 = sbr.rel (0) target = $region17
    $region16: #{dft_series_decomp.3} parent=1 // pred_region
      %s24 = ssub.s32 2048, 2048
      %25 = vsyncadd [#allocation4], %s24
      %s26 = sshll.u32 [#allocation3], 4
      %s27 = int_to_ptr.vmem [resolvable:$true] %s26
      %32 = dma.hbm_to_vmem [thread:$0]  %s3, 2048, %s27, [#allocation4], 128, 128, 8
    $region17: #{dft_series_decomp.3} parent=1 // pred_fallthru
      _
    // Predicated region
    $region18: #{dft_series_decomp.3} parent=1 // pred_check
      _
    $region19: #{dft_series_decomp.3} parent=1 // pred_check_branch
      %34 = sbr.rel (0) target = $region21
    $region20: #{dft_series_decomp.3} parent=1 // pred_region
      %35 = dma.done [#allocation4], 2048
    $region21: #{dft_series_decomp.3} parent=1 // pred_fallthru
      _
    %v36 = vld [vmem:[%s1] sm:$0xff]
    %v37 = vld [vmem:[%s2] sm:$0xff]
    %v38 = vld [vmem:[%s2 + $0x8] sm:$0xff]
    %vm39 = vcmask 130048
    %v41 = vsel %vm39, %v36, 0
    %43 = vmatprep.subr.mxu0 0.0
    %44 = vmatpush1.msra.mxu0 %v37
    %45 = vmatprep.subr.mxu0 0.0
    %46 = vmatpush1.msra.mxu0 %v38
    %47 = vmatprep.subr.mxu0 0.0
    %48 = vmatpush1.msra.mxu0 0.0
    %49 = vmatprep.subr.mxu0 0.0
    %50 = vmatpush1.msra.mxu0 0.0
    %51 = vmatprep.subr.mxu0 0.0
    %52 = vmatpush1.msra.mxu0 0.0
    %53 = vmatprep.subr.mxu0 0.0
    %54 = vmatpush1.msra.mxu0 0.0
    %55 = vmatprep.subr.mxu0 0.0
    %56 = vmatpush1.msra.mxu0 0.0
    %57 = vmatprep.subr.mxu0 0.0
    %58 = vmatpush1.msra.mxu0 0.0
    %59 = vmatprep.subr.mxu0 0.0
    %60 = vmatpush1.msra.mxu0 0.0
    %61 = vmatprep.subr.mxu0 0.0
    %62 = vmatpush1.msra.mxu0 0.0
    %63 = vmatprep.subr.mxu0 0.0
    %64 = vmatpush1.msra.mxu0 0.0
    %65 = vmatprep.subr.mxu0 0.0
    %66 = vmatpush1.msra.mxu0 0.0
    %67 = vmatprep.subr.mxu0 0.0
    %68 = vmatpush1.msra.mxu0 0.0
    %69 = vmatprep.subr.mxu0 0.0
    %70 = vmatpush1.msra.mxu0 0.0
    %71 = vmatprep.subr.mxu0 0.0
    %72 = vmatpush1.msra.mxu0 0.0
    %73 = vmatprep.subr.mxu0 0.0
    %74 = vmatpush1.msra.mxu0 0.0
    %75 = vmatprep.subr.mxu0 0.0
    %76 = vmatpush1.msra.mxu0 0.0
    %77 = vmatprep.subr.mxu0 0.0
    %78 = vmatpush1.msra.mxu0 0.0
    %79 = vmatprep.subr.mxu0 0.0
    %80 = vmatpush1.msra.mxu0 0.0
    %81 = vmatprep.subr.mxu0 0.0
    %82 = vmatpush1.msra.mxu0 0.0
    %83 = vmatprep.subr.mxu0 0.0
    %84 = vmatpush1.msra.mxu0 0.0
    %85 = vmatprep.subr.mxu0 0.0
    %86 = vmatpush1.msra.mxu0 0.0
    %87 = vmatprep.subr.mxu0 0.0
    %88 = vmatpush1.msra.mxu0 0.0
    %89 = vmatprep.subr.mxu0 0.0
    %90 = vmatpush1.msra.mxu0 0.0
    %91 = vmatprep.subr.mxu0 0.0
    %92 = vmatpush1.msra.mxu0 0.0
    %93 = vmatprep.subr.mxu0 0.0
    %94 = vmatpush1.msra.mxu0 0.0
    %95 = vmatprep.subr.mxu0 0.0
    %96 = vmatpush1.msra.mxu0 0.0
    %97 = vmatprep.subr.mxu0 0.0
    %98 = vmatpush1.msra.mxu0 0.0
    %99 = vmatprep.subr.mxu0 0.0
    %100 = vmatpush1.msra.mxu0 0.0
    %101 = vmatprep.subr.mxu0 0.0
    %102 = vmatpush1.msra.mxu0 0.0
    %103 = vmatprep.subr.mxu0 0.0
    %104 = vmatpush1.msra.mxu0 0.0
    %105 = vmatprep.subr.mxu0 0.0
    %106 = vmatpush1.msra.mxu0 0.0
    %107 = vmatprep.mubr.f32.mxu0 0.0
    %108 = vmatmul.mubr.f32.gmra.mrb[0].mxu0 %v41
    %v109 = vpop.f32.mrb[0].mxu0
    %v110 = vadd.f32 0.0, %v109
    %v111 = vpop.f32.mrb[0].mxu0
    %112 = vdwg.mxu0
    %v113 = vmul.f32 %v110, %v110
    %114 = vrot.lane.b32.xlu0 %v113, 64
    %v115 = vpop.permute.xlu0 %114
    %v116 = vadd.f32 %v113, %v115
    %s117 = smul.u32 0, 8
    %v118 = vlaneseq
    %v119 = vshrl.u32 %v118, 7
    %v120 = vstv %s117
    %v121 = vadd.s32 %v120, %v119
    %vm122 = vcmp.lt.s32.totalorder %v121, 4
    %v123 = vsel %vm122, 1, 0
    %vm124 = vcmp.eq.s32.totalorder %v123, 1
    %v125 = vsel %vm124, 0.0, %v116
    %s126 = sld [smem:[#allocation2]]
    %v127 = vstv %s126
    %vm128 = vcmp.gt.f32.partialorder %v125, %v127
    %v129 = vsel %vm128, 1, 0
    %v130 = vcvt.s32.f32 %v129
    %v131 = vmul.f32 %v110, %v130
    %v132 = vld [vmem:[#allocation3] sm:$0xff]
    %v133 = vld [vmem:[#allocation3 + $0x8] sm:$0xff]
    %v134 = vld [vmem:[#allocation3 + $0x10] sm:$0xff]
    %v135 = vld [vmem:[#allocation3 + $0x18] sm:$0xff]
    %v136 = vld [vmem:[#allocation3 + $0x20] sm:$0xff]
    %v137 = vld [vmem:[#allocation3 + $0x28] sm:$0xff]
    %v138 = vld [vmem:[#allocation3 + $0x30] sm:$0xff]
    %v139 = vld [vmem:[#allocation3 + $0x38] sm:$0xff]
    %v140 = vld [vmem:[#allocation3 + $0x40] sm:$0xff]
    %v141 = vld [vmem:[#allocation3 + $0x48] sm:$0xff]
    %v142 = vld [vmem:[#allocation3 + $0x50] sm:$0xff]
    %v143 = vld [vmem:[#allocation3 + $0x58] sm:$0xff]
    %v144 = vld [vmem:[#allocation3 + $0x60] sm:$0xff]
    %v145 = vld [vmem:[#allocation3 + $0x68] sm:$0xff]
    %v146 = vld [vmem:[#allocation3 + $0x70] sm:$0xff]
    %v147 = vld [vmem:[#allocation3 + $0x78] sm:$0xff]
    %148 = vmatprep.subr.mxu0 0.0
    %149 = vmatpush1.msra.mxu0 %v132
    %150 = vmatprep.subr.mxu0 0.0
    %151 = vmatpush1.msra.mxu0 %v133
    %152 = vmatprep.subr.mxu0 0.0
    %153 = vmatpush1.msra.mxu0 %v134
    %154 = vmatprep.subr.mxu0 0.0
    %155 = vmatpush1.msra.mxu0 %v135
    %156 = vmatprep.subr.mxu0 0.0
    %157 = vmatpush1.msra.mxu0 %v136
    %158 = vmatprep.subr.mxu0 0.0
    %159 = vmatpush1.msra.mxu0 %v137
    %160 = vmatprep.subr.mxu0 0.0
    %161 = vmatpush1.msra.mxu0 %v138
    %162 = vmatprep.subr.mxu0 0.0
    %163 = vmatpush1.msra.mxu0 %v139
    %164 = vmatprep.subr.mxu0 0.0
    %165 = vmatpush1.msra.mxu0 %v140
    %166 = vmatprep.subr.mxu0 0.0
    %167 = vmatpush1.msra.mxu0 %v141
    %168 = vmatprep.subr.mxu0 0.0
    %169 = vmatpush1.msra.mxu0 %v142
    %170 = vmatprep.subr.mxu0 0.0
    %171 = vmatpush1.msra.mxu0 %v143
    %172 = vmatprep.subr.mxu0 0.0
    %173 = vmatpush1.msra.mxu0 %v144
    %174 = vmatprep.subr.mxu0 0.0
    %175 = vmatpush1.msra.mxu0 %v145
    %176 = vmatprep.subr.mxu0 0.0
    %177 = vmatpush1.msra.mxu0 %v146
    %178 = vmatprep.subr.mxu0 0.0
    %179 = vmatpush1.msra.mxu0 %v147
    %180 = vmatprep.subr.mxu0 0.0
    %181 = vmatpush1.msra.mxu0 0.0
    %182 = vmatprep.subr.mxu0 0.0
    %183 = vmatpush1.msra.mxu0 0.0
    %184 = vmatprep.subr.mxu0 0.0
    %185 = vmatpush1.msra.mxu0 0.0
    %186 = vmatprep.subr.mxu0 0.0
    %187 = vmatpush1.msra.mxu0 0.0
    %188 = vmatprep.subr.mxu0 0.0
    %189 = vmatpush1.msra.mxu0 0.0
    %190 = vmatprep.subr.mxu0 0.0
    %191 = vmatpush1.msra.mxu0 0.0
    %192 = vmatprep.subr.mxu0 0.0
    %193 = vmatpush1.msra.mxu0 0.0
    %194 = vmatprep.subr.mxu0 0.0
    %195 = vmatpush1.msra.mxu0 0.0
    %196 = vmatprep.subr.mxu0 0.0
    %197 = vmatpush1.msra.mxu0 0.0
    %198 = vmatprep.subr.mxu0 0.0
    %199 = vmatpush1.msra.mxu0 0.0
    %200 = vmatprep.subr.mxu0 0.0
    %201 = vmatpush1.msra.mxu0 0.0
    %202 = vmatprep.subr.mxu0 0.0
    %203 = vmatpush1.msra.mxu0 0.0
    %204 = vmatprep.subr.mxu0 0.0
    %205 = vmatpush1.msra.mxu0 0.0
    %206 = vmatprep.subr.mxu0 0.0
    %207 = vmatpush1.msra.mxu0 0.0
    %208 = vmatprep.subr.mxu0 0.0
    %209 = vmatpush1.msra.mxu0 0.0
    %210 = vmatprep.subr.mxu0 0.0
    %211 = vmatpush1.msra.mxu0 0.0
    %212 = vmatprep.mubr.f32.mxu0 0.0
    %213 = vmatmul.mubr.f32.gmra.mrb[0].mxu0 %v131
    %v214 = vpop.f32.mrb[0].mxu0
    %v215 = vadd.f32 0.0, %v214
    %v216 = vpop.f32.mrb[0].mxu0
    %217 = vdwg.mxu0
    %218 = vst.msk [vmem:[#allocation6] sm:$0xff] %vm39, %v215
    %v219 = vsub.f32 %v36, %v215
    %220 = vst.msk [vmem:[#allocation7] sm:$0xff] %vm39, %v219
    // Predicated region
    $region22: #{dft_series_decomp.3} parent=1 // pred_check
      _
    $region23: #{dft_series_decomp.3} parent=1 // pred_check_branch
      %222 = sbr.rel (0) target = $region25
    $region24: #{dft_series_decomp.3} parent=1 // pred_region
      %s224 = ssub.s32 128, 128
      %225 = vsyncadd [#allocation5], %s224
      %s227 = sshll.u32 [#allocation6], 4
      %s228 = int_to_ptr.vmem [resolvable:$true] %s227
      %230 = dma.vmem_to_hbm [thread:$0]  %s228, 128, %s4, [#allocation5]
    $region25: #{dft_series_decomp.3} parent=1 // pred_fallthru
      _
    // Predicated region
    $region26: #{dft_series_decomp.3} parent=1 // pred_check
      _
    $region27: #{dft_series_decomp.3} parent=1 // pred_check_branch
      %232 = sbr.rel (0) target = $region29
    $region28: #{dft_series_decomp.3} parent=1 // pred_region
      %s234 = ssub.s32 128, 128
      %235 = vsyncadd [#allocation8], %s234
      %s237 = sshll.u32 [#allocation7], 4
      %s238 = int_to_ptr.vmem [resolvable:$true] %s237
      %240 = dma.vmem_to_hbm [thread:$0]  %s238, 128, %s5, [#allocation8]
    $region29: #{dft_series_decomp.3} parent=1 // pred_fallthru
      _
    // Predicated region
    $region30: #{dft_series_decomp.3} parent=1 // pred_check
      _
    $region31: #{dft_series_decomp.3} parent=1 // pred_check_branch
      %242 = sbr.rel (0) target = $region33
    $region32: #{dft_series_decomp.3} parent=1 // pred_region
      %243 = dma.done [#allocation5], 128
    $region33: #{dft_series_decomp.3} parent=1 // pred_fallthru
      _
    // Predicated region
    $region34: #{dft_series_decomp.3} parent=1 // pred_check
      _
    $region35: #{dft_series_decomp.3} parent=1 // pred_check_branch
      %245 = sbr.rel (0) target = $region37
    $region36: #{dft_series_decomp.3} parent=1 // pred_region
      %246 = dma.done [#allocation8], 128
    $region37: #{dft_series_decomp.3} parent=1 // pred_fallthru
      _
    %247 = vsyncpa [#allocation4], 1
    %248 = vsyncpa [#allocation5], 1
    %249 = vsyncpa [#allocation8], 1

</llo_original>
